<compile_context>
chip_gen: v6e
topology: v6e:2x2x1
jax: 0.10.0
libtpu: 0.0.40
codegen_flags: <defaults>
</compile_context>

<pallas_src>
import jax
import jax.numpy as jnp
from jax import lax
from jax.experimental import pallas as pl
from jax.experimental.pallas import tpu as pltpu

hidden_size = 64
num_features = 20
input_size = num_features
num_classes = 3

C_PAD = 8        # class dim padded to one sublane group (3 -> 8), zero rows
MAX_TB = 8192    # batch-tile cap: ~8.6 MiB double-buffered, v5e/v6e/v7x safe


def _round_up(n, m):
    return ((n + m - 1) // m) * m


def _cdiv(a, b):
    return -(-a // b)


def mlp_kernel(x_ref, w1_ref, b1_ref, w2t_ref, b2t_ref, o_ref):
    # fc1 + ReLU on the (TB, F) batch tile.
    x = x_ref[...]                                                   # (TB, F)
    h = jnp.dot(x, w1_ref[...], preferred_element_type=jnp.float32) + b1_ref[...]
    h = jnp.maximum(h, 0.0)                                          # (TB, H)
    # fc2, transposed: out_T = W2^T @ h^T  (contract over H, batch -> lanes).
    out_t = lax.dot_general(
        w2t_ref[...], h,
        dimension_numbers=(((1,), (1,)), ((), ())),
        preferred_element_type=jnp.float32,
    ) + b2t_ref[...]                                                 # (C_PAD, TB)
    o_ref[...] = out_t.astype(o_ref.dtype)


@jax.jit
def multiclass_nn_forward(x, w1, b1, w2, b2):
    B, F = x.shape
    H = w1.shape[1]
    C = w2.shape[1]

    # Transposed classifier params, zero-padded on the sublane axis (3 -> 8).
    w2t = jnp.zeros((C_PAD, H), w2.dtype).at[:C, :].set(w2.T)       # (8, H)
    b2t = jnp.zeros((C_PAD, 1), b2.dtype).at[:C, :].set(b2.reshape(C, 1))

    # Batch tile: multiple of 128 (it is the lane dim of the transposed
    # output), capped at MAX_TB.  No padding of x: ragged last block is
    # handled by Pallas (masked writes / discarded garbage reads).
    tb = _round_up(min(B, MAX_TB), 128)
    if B >= 256:
        # Prefer >= 2 grid steps once the extra ~0.35 us step is noise, so
        # v7x's two TensorCores both get work ("parallel" grid axis).
        tb = min(tb, _round_up(_cdiv(B, 2), 128))
    grid_b = _cdiv(B, tb)
    b_out = grid_b * tb   # output lane extent padded to a tile multiple

    out_t = pl.pallas_call(
        mlp_kernel,
        out_shape=jax.ShapeDtypeStruct((C_PAD, b_out), jnp.float32),
        grid=(grid_b,),
        in_specs=[
            # x is the only operand scaling with B: streamed / double-buffered.
            pl.BlockSpec((tb, F), lambda i: (i, 0)),
            # Weights/biases: constant index_map -> VMEM-resident across grid.
            pl.BlockSpec((F, H), lambda i: (0, 0)),
            pl.BlockSpec((1, H), lambda i: (0, 0)),
            pl.BlockSpec((C_PAD, H), lambda i: (0, 0)),
            pl.BlockSpec((C_PAD, 1), lambda i: (0, 0)),
        ],
        out_specs=pl.BlockSpec((C_PAD, tb), lambda i: (0, i)),
        compiler_params=pltpu.CompilerParams(
            dimension_semantics=("parallel",),
        ),
    )(x, w1, b1, w2t, b2t)

    # Strip class padding (rows 3..7 are zero) and batch padding, then
    # transpose back to the caller-visible (B, C) layout (tiny: 3*B floats).
    return out_t[:C, :B].T


def init_params(key):
    # Deterministic init mimicking nn.Linear's uniform(-1/sqrt(fan_in), ...).
    k1, k2, k3, k4 = jax.random.split(key, 4)
    bound1 = 1.0 / jnp.sqrt(float(input_size))
    bound2 = 1.0 / jnp.sqrt(float(hidden_size))
    w1 = jax.random.uniform(k1, (input_size, hidden_size), jnp.float32, -bound1, bound1)
    b1 = jax.random.uniform(k2, (1, hidden_size), jnp.float32, -bound1, bound1)
    w2 = jax.random.uniform(k3, (hidden_size, num_classes), jnp.float32, -bound2, bound2)
    b2 = jax.random.uniform(k4, (1, num_classes), jnp.float32, -bound2, bound2)
    return w1, b1, w2, b2


def _reference(x, w1, b1, w2, b2):
    return jnp.maximum(x @ w1 + b1, 0.0) @ w2 + b2


if __name__ == "__main__":
    key = jax.random.PRNGKey(0)
    k_x, k_x2, k_p = jax.random.split(key, 3)
    w1, b1, w2, b2 = init_params(k_p)

    # Small batch: single ragged grid step (block bigger than the array).
    batch = 8
    x = jax.random.normal(k_x, (batch, num_features), jnp.float32)
    out = jax.block_until_ready(multiclass_nn_forward(x, w1, b1, w2, b2))
    ref = _reference(x, w1, b1, w2, b2)
    assert out.shape == (batch, num_classes)
    assert jnp.allclose(out, ref, atol=1e-5, rtol=1e-5)

    # Larger, non-multiple-of-tile batch: exercises the >=2-step parallel
    # grid and the ragged last block (no wrapper-side padding of x).
    batch2 = 2048 + 40
    x2 = jax.random.normal(k_x2, (batch2, num_features), jnp.float32)
    out2 = jax.block_until_ready(multiclass_nn_forward(x2, w1, b1, w2, b2))
    ref2 = _reference(x2, w1, b1, w2, b2)
    assert out2.shape == (batch2, num_classes)
    assert jnp.allclose(out2, ref2, atol=1e-5, rtol=1e-5)

    print("KERNEL_OK")
</pallas_src>

<mosaic_0001>
module attributes {stable_mosaic.version = 11 : i64} {
  func.func @mlp_kernel(%arg0: i32, %arg1: memref<128x20xf32, #tpu.memory_space<vmem>>, %arg2: memref<20x64xf32, #tpu.memory_space<vmem>>, %arg3: memref<1x64xf32, #tpu.memory_space<vmem>>, %arg4: memref<8x64xf32, #tpu.memory_space<vmem>>, %arg5: memref<8x1xf32, #tpu.memory_space<vmem>>, %arg6: memref<8x128xf32, #tpu.memory_space<vmem>>) attributes {dimension_semantics = [#tpu.dimension_semantics<parallel>], iteration_bounds = array<i64: 1>, scalar_prefetch = 0 : i64, scratch_operands = 0 : i64, tpu.core_type = #tpu.core_type<tc>, window_params = [{transform_indices = @transform_0, window_bounds = array<i64: 128, 20>}, {pipeline_mode = #tpu.pipeline_mode<synchronous>, transform_indices = @transform_1, window_bounds = array<i64: 20, 64>}, {pipeline_mode = #tpu.pipeline_mode<synchronous>, transform_indices = @transform_2, window_bounds = array<i64: 1, 64>}, {pipeline_mode = #tpu.pipeline_mode<synchronous>, transform_indices = @transform_3, window_bounds = array<i64: 8, 64>}, {pipeline_mode = #tpu.pipeline_mode<synchronous>, transform_indices = @transform_4, window_bounds = array<i64: 8, 1>}, {transform_indices = @transform_5, window_bounds = array<i64: 8, 128>}]} {
    %c0 = arith.constant 0 : index
    %c0_0 = arith.constant 0 : index
    %0 = vector.load %arg1[%c0, %c0_0] : memref<128x20xf32, #tpu.memory_space<vmem>>, vector<128x20xf32>
    %c0_1 = arith.constant 0 : index
    %c0_2 = arith.constant 0 : index
    %1 = vector.load %arg2[%c0_1, %c0_2] : memref<20x64xf32, #tpu.memory_space<vmem>>, vector<20x64xf32>
    %cst = arith.constant dense<0.000000e+00> : vector<128x64xf32>
    %2 = tpu.matmul %0, %1, %cst {dimension_numbers = #tpu.dot_dimension_numbers<[1], [0], [0], [1], [0, 0, 1, 1], [], []>} : vector<128x20xf32>, vector<20x64xf32>, vector<128x64xf32> -> vector<128x64xf32>
    %c0_3 = arith.constant 0 : index
    %c0_4 = arith.constant 0 : index
    %3 = vector.load %arg3[%c0_3, %c0_4] : memref<1x64xf32, #tpu.memory_space<vmem>>, vector<1x64xf32>
    %4 = vector.broadcast %3 : vector<1x64xf32> to vector<128x64xf32>
    %5 = arith.addf %2, %4 : vector<128x64xf32>
    %cst_5 = arith.constant 0.000000e+00 : f32
    %6 = vector.broadcast %cst_5 : f32 to vector<128x64xf32>
    %7 = arith.maximumf %5, %6 : vector<128x64xf32>
    %c0_6 = arith.constant 0 : index
    %c0_7 = arith.constant 0 : index
    %8 = vector.load %arg4[%c0_6, %c0_7] : memref<8x64xf32, #tpu.memory_space<vmem>>, vector<8x64xf32>
    %cst_8 = arith.constant dense<0.000000e+00> : vector<8x128xf32>
    %9 = tpu.matmul %8, %7, %cst_8 {dimension_numbers = #tpu.dot_dimension_numbers<[1], [1], [0], [0], [0, 0, 1, 0], [], []>} : vector<8x64xf32>, vector<128x64xf32>, vector<8x128xf32> -> vector<8x128xf32>
    %c0_9 = arith.constant 0 : index
    %c0_10 = arith.constant 0 : index
    %10 = vector.load %arg5[%c0_9, %c0_10] : memref<8x1xf32, #tpu.memory_space<vmem>>, vector<8x1xf32>
    %11 = vector.broadcast %10 : vector<8x1xf32> to vector<8x128xf32>
    %12 = arith.addf %9, %11 : vector<8x128xf32>
    %c0_11 = arith.constant 0 : index
    %c0_12 = arith.constant 0 : index
    %13 = vector.load %arg6[%c0_11, %c0_12] : memref<8x128xf32, #tpu.memory_space<vmem>>, vector<8x128xf32>
    tpu.vector_store %arg6[%c0_11, %c0_12], %12 {strides = array<i32>} : memref<8x128xf32, #tpu.memory_space<vmem>>, vector<8x128xf32>,
    return
  }
  func.func @transform_0(%arg0: i32) -> (i32, i32) {
    %c0_i32 = arith.constant 0 : i32
    %c0_i32_0 = arith.constant 0 : i32
    return %arg0, %c0_i32 : i32, i32
  }
  func.func @transform_1(%arg0: i32) -> (i32, i32) {
    %c0_i32 = arith.constant 0 : i32
    %c0_i32_0 = arith.constant 0 : i32
    %c0_i32_1 = arith.constant 0 : i32
    return %c0_i32, %c0_i32_0 : i32, i32
  }
  func.func @transform_2(%arg0: i32) -> (i32, i32) {
    %c0_i32 = arith.constant 0 : i32
    %c0_i32_0 = arith.constant 0 : i32
    %c0_i32_1 = arith.constant 0 : i32
    return %c0_i32, %c0_i32_0 : i32, i32
  }
  func.func @transform_3(%arg0: i32) -> (i32, i32) {
    %c0_i32 = arith.constant 0 : i32
    %c0_i32_0 = arith.constant 0 : i32
    %c0_i32_1 = arith.constant 0 : i32
    return %c0_i32, %c0_i32_0 : i32, i32
  }
  func.func @transform_4(%arg0: i32) -> (i32, i32) {
    %c0_i32 = arith.constant 0 : i32
    %c0_i32_0 = arith.constant 0 : i32
    %c0_i32_1 = arith.constant 0 : i32
    return %c0_i32, %c0_i32_0 : i32, i32
  }
  func.func @transform_5(%arg0: i32) -> (i32, i32) {
    %c0_i32 = arith.constant 0 : i32
    %c0_i32_0 = arith.constant 0 : i32
    return %c0_i32, %arg0 : i32, i32
  }
}

</mosaic_0001>

<llo_original>
// kernel: multiclass_nn_forward.1
$region0: #{multiclass_nn_forward.1}
  #allocation0 [shape = 'u32[]', space=smem, size = 0x4, offset = 0x4, fixed_abs, tag = 'smem constant byte address 0x4 - core index']
  #allocation1 [shape = 'u32[144,128]{1,0:T(1,128)}', space=vmem, size = 0x12000, scoped, tag = 'internal scratch']
  %s0 = inlined_call_operand.vmem [shape: f32[8,20], index: 0, kind: input, shape index: {}]
  %s1 = inlined_call_operand.vmem [shape: f32[20,64], index: 1, kind: input, shape index: {}]
  %s2 = inlined_call_operand.vmem [shape: f32[1,64], index: 2, kind: input, shape index: {}]
  %s3 = inlined_call_operand.vmem [shape: f32[8,64], index: 3, kind: input, shape index: {}]
  %s4 = inlined_call_operand.vmem [shape: f32[8,1], index: 4, kind: input, shape index: {}]
  %s5 = inlined_call_operand.vmem [shape: f32[8,128], index: 5, kind: output, shape index: {}]
  %s6 = sld [smem:[#allocation0]]
  $region30: #{multiclass_nn_forward.1} parent=0
    _
  %s8 = ssub.s32 1, %s6
  %s9 = scalar_select 0, %s8, %s6
  // Predicated region
  $region2: #{multiclass_nn_forward.1} parent=0 // pred_check
    _
  $region3: #{multiclass_nn_forward.1} parent=0 // pred_check_branch
    %11 = sbr.rel (0) target = $region5
  $region4: #{multiclass_nn_forward.1} parent=0 // pred_region
    _
  $region5: #{multiclass_nn_forward.1} parent=0 // pred_fallthru
    _
  // Predicated region
  $region6: #{multiclass_nn_forward.1} parent=0 // pred_check
    _
  $region7: #{multiclass_nn_forward.1} parent=0 // pred_check_branch
    %13 = sbr.rel (0) target = $region9
  $region8: #{multiclass_nn_forward.1} parent=0 // pred_region
    _
  $region9: #{multiclass_nn_forward.1} parent=0 // pred_fallthru
    _
  // Predicated region
  $region10: #{multiclass_nn_forward.1} parent=0 // pred_check
    _
  $region11: #{multiclass_nn_forward.1} parent=0 // pred_check_branch
    %15 = sbr.rel (0) target = $region13
  $region12: #{multiclass_nn_forward.1} parent=0 // pred_region
    _
  $region13: #{multiclass_nn_forward.1} parent=0 // pred_fallthru
    _
  // Predicated region
  $region14: #{multiclass_nn_forward.1} parent=0 // pred_check
    _
  $region15: #{multiclass_nn_forward.1} parent=0 // pred_check_branch
    %17 = sbr.rel (0) target = $region17
  $region16: #{multiclass_nn_forward.1} parent=0 // pred_region
    _
  $region17: #{multiclass_nn_forward.1} parent=0 // pred_fallthru
    _
  // Predicated region
  $region18: #{multiclass_nn_forward.1} parent=0 // pred_check
    _
  $region19: #{multiclass_nn_forward.1} parent=0 // pred_check_branch
    %19 = sbr.rel (0) target = $region21
  $region20: #{multiclass_nn_forward.1} parent=0 // pred_region
    _
  $region21: #{multiclass_nn_forward.1} parent=0 // pred_fallthru
    _
  %v20 = vld [vmem:[%s0] sm:$0xff]
  %v21 = vld [vmem:[%s0 + $0x8] sm:$0xff]
  %v22 = vld [vmem:[%s0 + $0x10] sm:$0xff]
  %v23 = vld [vmem:[%s0 + $0x18] sm:$0xff]
  %v24 = vld [vmem:[%s0 + $0x20] sm:$0xff]
  %v25 = vld [vmem:[%s0 + $0x28] sm:$0xff]
  %v26 = vld [vmem:[%s0 + $0x30] sm:$0xff]
  %v27 = vld [vmem:[%s0 + $0x38] sm:$0xff]
  %v28 = vld [vmem:[%s0 + $0x40] sm:$0xff]
  %v29 = vld [vmem:[%s0 + $0x48] sm:$0xff]
  %v30 = vld [vmem:[%s0 + $0x50] sm:$0xff]
  %v31 = vld [vmem:[%s0 + $0x58] sm:$0xff]
  %v32 = vld [vmem:[%s0 + $0x60] sm:$0xff]
  %v33 = vld [vmem:[%s0 + $0x68] sm:$0xff]
  %v34 = vld [vmem:[%s0 + $0x70] sm:$0xff]
  %v35 = vld [vmem:[%s0 + $0x78] sm:$0xff]
  %v36 = vld [vmem:[%s1] sm:$0xff]
  %v37 = vld [vmem:[%s1 + $0x8] sm:$0xff]
  %v38 = vld [vmem:[%s1 + $0x10] sm:$0xf]
  %v39 = vld [vmem:[%s2] sm:$0x1]
  %v41 = vlaneseq
  %v42 = vshrl.u32 %v41, 7
  %v43 = vsub.s32 0, %v42
  %v44 = vrot.slane %v39, %v43
  %vm46 = vcmask 162816
  %v48 = vsel %vm46, %v20, 0
  %v51 = vsel %vm46, %v21, 0
  %v54 = vsel %vm46, %v22, 0
  %v57 = vsel %vm46, %v23, 0
  %v60 = vsel %vm46, %v24, 0
  %v63 = vsel %vm46, %v25, 0
  %v66 = vsel %vm46, %v26, 0
  %v69 = vsel %vm46, %v27, 0
  %v72 = vsel %vm46, %v28, 0
  %v75 = vsel %vm46, %v29, 0
  %v78 = vsel %vm46, %v30, 0
  %v81 = vsel %vm46, %v31, 0
  %v84 = vsel %vm46, %v32, 0
  %v87 = vsel %vm46, %v33, 0
  %v90 = vsel %vm46, %v34, 0
  %v93 = vsel %vm46, %v35, 0
  %vm95 = vcmask 1043456
  %v97 = vsel %vm95, %v38, 0
  %99 = vmatprep.subr.mxu0 0.0
  %100 = vmatpush1.msra.mxu0 0.0
  %101 = vmatprep.subr.mxu0 0.0
  %102 = vmatpush1.msra.mxu0 0.0
  %103 = vmatprep.subr.mxu0 0.0
  %104 = vmatpush1.msra.mxu0 0.0
  %105 = vmatprep.subr.mxu0 0.0
  %106 = vmatpush1.msra.mxu0 0.0
  %107 = vmatprep.subr.mxu0 0.0
  %108 = vmatpush1.msra.mxu0 0.0
  %109 = vmatprep.subr.mxu0 0.0
  %110 = vmatpush1.msra.mxu0 0.0
  %111 = vmatprep.subr.mxu0 0.0
  %112 = vmatpush1.msra.mxu0 0.0
  %113 = vmatprep.subr.mxu0 0.0
  %114 = vmatpush1.msra.mxu0 0.0
  %115 = vmatprep.subr.mxu0 0.0
  %116 = vmatpush1.msra.mxu0 0.0
  %117 = vmatprep.subr.mxu0 0.0
  %118 = vmatpush1.msra.mxu0 0.0
  %119 = vmatprep.subr.mxu0 0.0
  %120 = vmatpush1.msra.mxu0 0.0
  %121 = vmatprep.subr.mxu0 0.0
  %122 = vmatpush1.msra.mxu0 0.0
  %123 = vmatprep.subr.mxu0 0.0
  %124 = vmatpush1.msra.mxu0 0.0
  %125 = vmatprep.subr.mxu0 0.0
  %126 = vmatpush1.msra.mxu0 %v97
  %127 = vmatprep.subr.mxu0 0.0
  %128 = vmatpush1.msra.mxu0 %v37
  %129 = vmatprep.subr.mxu0 0.0
  %130 = vmatpush1.msra.mxu0 %v36
  %131 = vmatprep.subr.mxu0 0.0
  %132 = vmatpush2.msra.mxu0 0.0
  %133 = vmatprep.subr.mxu0 0.0
  %134 = vmatpush2.msra.mxu0 0.0
  %135 = vmatprep.subr.mxu0 0.0
  %136 = vmatpush2.msra.mxu0 0.0
  %137 = vmatprep.subr.mxu0 0.0
  %138 = vmatpush2.msra.mxu0 0.0
  %139 = vmatprep.subr.mxu0 0.0
  %140 = vmatpush2.msra.mxu0 0.0
  %141 = vmatprep.subr.mxu0 0.0
  %142 = vmatpush2.msra.mxu0 0.0
  %143 = vmatprep.subr.mxu0 0.0
  %144 = vmatpush2.msra.mxu0 0.0
  %145 = vmatprep.subr.mxu0 0.0
  %146 = vmatpush2.msra.mxu0 0.0
  %147 = vmatprep.subr.mxu0 0.0
  %148 = vmatpush2.msra.mxu0 0.0
  %149 = vmatprep.subr.mxu0 0.0
  %150 = vmatpush2.msra.mxu0 0.0
  %151 = vmatprep.subr.mxu0 0.0
  %152 = vmatpush2.msra.mxu0 0.0
  %153 = vmatprep.subr.mxu0 0.0
  %154 = vmatpush2.msra.mxu0 0.0
  %155 = vmatprep.subr.mxu0 0.0
  %156 = vmatpush2.msra.mxu0 0.0
  %157 = vmatprep.subr.mxu0 0.0
  %158 = vmatpush2.msra.mxu0 0.0
  %159 = vmatprep.subr.mxu0 0.0
  %160 = vmatpush2.msra.mxu0 0.0
  %161 = vmatprep.subr.mxu0 0.0
  %162 = vmatpush2.msra.mxu0 0.0
  %163 = vmatprep.mubr.f32.mxu0 0.0
  %164 = vmatmul.mubr.f32.gmra.mxu0 %v48
  %v165 = vpop.f32.mrf.mxu0
  %v166 = vadd.f32 %v44, %v165
  %v167 = vpop.f32.mrf.mxu0
  %168 = vmatprep.mubr.f32.mxu0 0.0
  %169 = vmatmul.mubr.f32.gmra.mxu0 %v51
  %v170 = vpop.f32.mrf.mxu0
  %v171 = vadd.f32 %v44, %v170
  %v172 = vpop.f32.mrf.mxu0
  %173 = vmatprep.mubr.f32.mxu0 0.0
  %174 = vmatmul.mubr.f32.gmra.mxu0 %v54
  %v175 = vpop.f32.mrf.mxu0
  %v176 = vadd.f32 %v44, %v175
  %v177 = vpop.f32.mrf.mxu0
  %178 = vmatprep.mubr.f32.mxu0 0.0
  %179 = vmatmul.mubr.f32.gmra.mxu0 %v57
  %v180 = vpop.f32.mrf.mxu0
  %v181 = vadd.f32 %v44, %v180
  %v182 = vpop.f32.mrf.mxu0
  %183 = vmatprep.mubr.f32.mxu0 0.0
  %184 = vmatmul.mubr.f32.gmra.mxu0 %v60
  %v185 = vpop.f32.mrf.mxu0
  %v186 = vadd.f32 %v44, %v185
  %v187 = vpop.f32.mrf.mxu0
  %188 = vmatprep.mubr.f32.mxu0 0.0
  %189 = vmatmul.mubr.f32.gmra.mxu0 %v63
  %v190 = vpop.f32.mrf.mxu0
  %v191 = vadd.f32 %v44, %v190
  %v192 = vpop.f32.mrf.mxu0
  %193 = vmatprep.mubr.f32.mxu0 0.0
  %194 = vmatmul.mubr.f32.gmra.mxu0 %v66
  %v195 = vpop.f32.mrf.mxu0
  %v196 = vadd.f32 %v44, %v195
  %v197 = vpop.f32.mrf.mxu0
  %198 = vmatprep.mubr.f32.mxu0 0.0
  %199 = vmatmul.mubr.f32.gmra.mxu0 %v69
  %v200 = vpop.f32.mrf.mxu0
  %v201 = vadd.f32 %v44, %v200
  %v202 = vpop.f32.mrf.mxu0
  %203 = vmatprep.mubr.f32.mxu0 0.0
  %204 = vmatmul.mubr.f32.gmra.mxu0 %v72
  %v205 = vpop.f32.mrf.mxu0
  %v206 = vadd.f32 %v44, %v205
  %v207 = vpop.f32.mrf.mxu0
  %208 = vmatprep.mubr.f32.mxu0 0.0
  %209 = vmatmul.mubr.f32.gmra.mxu0 %v75
  %v210 = vpop.f32.mrf.mxu0
  %v211 = vadd.f32 %v44, %v210
  %v212 = vpop.f32.mrf.mxu0
  %213 = vmatprep.mubr.f32.mxu0 0.0
  %214 = vmatmul.mubr.f32.gmra.mxu0 %v78
  %v215 = vpop.f32.mrf.mxu0
  %v216 = vadd.f32 %v44, %v215
  %v217 = vpop.f32.mrf.mxu0
  %218 = vmatprep.mubr.f32.mxu0 0.0
  %219 = vmatmul.mubr.f32.gmra.mxu0 %v81
  %v220 = vpop.f32.mrf.mxu0
  %v221 = vadd.f32 %v44, %v220
  %v222 = vpop.f32.mrf.mxu0
  %223 = vmatprep.mubr.f32.mxu0 0.0
  %224 = vmatmul.mubr.f32.gmra.mxu0 %v84
  %v225 = vpop.f32.mrf.mxu0
  %v226 = vadd.f32 %v44, %v225
  %v227 = vpop.f32.mrf.mxu0
  %228 = vmatprep.mubr.f32.mxu0 0.0
  %229 = vmatmul.mubr.f32.gmra.mxu0 %v87
  %v230 = vpop.f32.mrf.mxu0
  %v231 = vadd.f32 %v44, %v230
  %v232 = vpop.f32.mrf.mxu0
  %233 = vmatprep.mubr.f32.mxu0 0.0
  %234 = vmatmul.mubr.f32.gmra.mxu0 %v90
  %v235 = vpop.f32.mrf.mxu0
  %v236 = vadd.f32 %v44, %v235
  %v237 = vpop.f32.mrf.mxu0
  %238 = vmatprep.mubr.f32.mxu0 0.0
  %239 = vmatmul.mubr.f32.gmra.mxu0 %v93
  %v240 = vpop.f32.mrf.mxu0
  %v241 = vadd.f32 %v44, %v240
  %v242 = vpop.f32.mrf.mxu0
  %243 = vdwg.mxu0
  %v244 = vmax.f32 %v166, 0.0
  %v245 = vmax.f32 %v171, 0.0
  %v246 = vmax.f32 %v176, 0.0
  %v247 = vmax.f32 %v181, 0.0
  %v248 = vmax.f32 %v186, 0.0
  %v249 = vmax.f32 %v191, 0.0
  %v250 = vmax.f32 %v196, 0.0
  %v251 = vmax.f32 %v201, 0.0
  %v252 = vmax.f32 %v206, 0.0
  %v253 = vmax.f32 %v211, 0.0
  %v254 = vmax.f32 %v216, 0.0
  %v255 = vmax.f32 %v221, 0.0
  %v256 = vmax.f32 %v226, 0.0
  %v257 = vmax.f32 %v231, 0.0
  %v258 = vmax.f32 %v236, 0.0
  %v259 = vmax.f32 %v241, 0.0
  %v260 = vld [vmem:[%s3] sm:$0xff]
  %v261 = vld [vmem:[%s4] sm:$0xff]
  %263 = vset.pattern.permute.xlu0 0
  %264 = vperm.xlu0 %263, %v261
  %v265 = vpop.permute.xlu0 %264
  %vm267 = vcmask 523264
  %v269 = vsel %vm267, %v260, 0
  %v272 = vsel %vm267, %v244, 0
  %v275 = vsel %vm267, %v245, 0
  %v278 = vsel %vm267, %v246, 0
  %v281 = vsel %vm267, %v247, 0
  %v284 = vsel %vm267, %v248, 0
  %v287 = vsel %vm267, %v249, 0
  %v290 = vsel %vm267, %v250, 0
  %v293 = vsel %vm267, %v251, 0
  %v296 = vsel %vm267, %v252, 0
  %v299 = vsel %vm267, %v253, 0
  %v302 = vsel %vm267, %v254, 0
  %v305 = vsel %vm267, %v255, 0
  %v308 = vsel %vm267, %v256, 0
  %v311 = vsel %vm267, %v257, 0
  %v314 = vsel %vm267, %v258, 0
  %v317 = vsel %vm267, %v259, 0
  %319 = vmatprep.subr.mxu0 0.0
  %320 = vmatpush1.xpose.msra.mxu0 %v317
  %321 = vmatprep.subr.mxu0 0.0
  %322 = vmatpush1.xpose.msra.mxu0 %v314
  %323 = vmatprep.subr.mxu0 0.0
  %324 = vmatpush1.xpose.msra.mxu0 %v311
  %325 = vmatprep.subr.mxu0 0.0
  %326 = vmatpush1.xpose.msra.mxu0 %v308
  %327 = vmatprep.subr.mxu0 0.0
  %328 = vmatpush1.xpose.msra.mxu0 %v305
  %329 = vmatprep.subr.mxu0 0.0
  %330 = vmatpush1.xpose.msra.mxu0 %v302
  %331 = vmatprep.subr.mxu0 0.0
  %332 = vmatpush1.xpose.msra.mxu0 %v299
  %333 = vmatprep.subr.mxu0 0.0
  %334 = vmatpush1.xpose.msra.mxu0 %v296
  %335 = vmatprep.subr.mxu0 0.0
  %336 = vmatpush1.xpose.msra.mxu0 %v293
  %337 = vmatprep.subr.mxu0 0.0
  %338 = vmatpush1.xpose.msra.mxu0 %v290
  %339 = vmatprep.subr.mxu0 0.0
  %340 = vmatpush1.xpose.msra.mxu0 %v287
  %341 = vmatprep.subr.mxu0 0.0
  %342 = vmatpush1.xpose.msra.mxu0 %v284
  %343 = vmatprep.subr.mxu0 0.0
  %344 = vmatpush1.xpose.msra.mxu0 %v281
  %345 = vmatprep.subr.mxu0 0.0
  %346 = vmatpush1.xpose.msra.mxu0 %v278
  %347 = vmatprep.subr.mxu0 0.0
  %348 = vmatpush1.xpose.msra.mxu0 %v275
  %349 = vmatprep.subr.mxu0 0.0
  %350 = vmatpush1.xpose.msra.mxu0 %v272
  %351 = vmatprep.subr.mxu0 0.0
  %352 = vmatpush2.xpose.msra.mxu0 0.0
  %353 = vmatprep.subr.mxu0 0.0
  %354 = vmatpush2.xpose.msra.mxu0 0.0
  %355 = vmatprep.subr.mxu0 0.0
  %356 = vmatpush2.xpose.msra.mxu0 0.0
  %357 = vmatprep.subr.mxu0 0.0
  %358 = vmatpush2.xpose.msra.mxu0 0.0
  %359 = vmatprep.subr.mxu0 0.0
  %360 = vmatpush2.xpose.msra.mxu0 0.0
  %361 = vmatprep.subr.mxu0 0.0
  %362 = vmatpush2.xpose.msra.mxu0 0.0
  %363 = vmatprep.subr.mxu0 0.0
  %364 = vmatpush2.xpose.msra.mxu0 0.0
  %365 = vmatprep.subr.mxu0 0.0
  %366 = vmatpush2.xpose.msra.mxu0 0.0
  %367 = vmatprep.subr.mxu0 0.0
  %368 = vmatpush2.xpose.msra.mxu0 0.0
  %369 = vmatprep.subr.mxu0 0.0
  %370 = vmatpush2.xpose.msra.mxu0 0.0
  %371 = vmatprep.subr.mxu0 0.0
  %372 = vmatpush2.xpose.msra.mxu0 0.0
  %373 = vmatprep.subr.mxu0 0.0
  %374 = vmatpush2.xpose.msra.mxu0 0.0
  %375 = vmatprep.subr.mxu0 0.0
  %376 = vmatpush2.xpose.msra.mxu0 0.0
  %377 = vmatprep.subr.mxu0 0.0
  %378 = vmatpush2.xpose.msra.mxu0 0.0
  %379 = vmatprep.subr.mxu0 0.0
  %380 = vmatpush2.xpose.msra.mxu0 0.0
  %381 = vmatprep.subr.mxu0 0.0
  %382 = vmatpush2.xpose.msra.mxu0 0.0
  %383 = vmatprep.mubr.f32.mxu0 0.0
  %384 = vmatmul.mubr.f32.gmra.mxu0 %v269
  %v385 = vpop.f32.mrf.mxu0
  %v386 = vadd.f32 %v265, %v385
  %v387 = vpop.f32.mrf.mxu0
  %388 = vdwg.mxu0
  %389 = vst [vmem:[%s5] sm:$0xff] %v386
  // Predicated region
  $region22: #{multiclass_nn_forward.1} parent=0 // pred_check
    _
  $region23: #{multiclass_nn_forward.1} parent=0 // pred_check_branch
    %391 = sbr.rel (0) target = $region25
  $region24: #{multiclass_nn_forward.1} parent=0 // pred_region
    _
  $region25: #{multiclass_nn_forward.1} parent=0 // pred_fallthru
    _
  // Predicated region
  $region26: #{multiclass_nn_forward.1} parent=0 // pred_check
    _
  $region27: #{multiclass_nn_forward.1} parent=0 // pred_check_branch
    %393 = sbr.rel (0) target = $region29
  $region28: #{multiclass_nn_forward.1} parent=0 // pred_region
    _
  $region29: #{multiclass_nn_forward.1} parent=0 // pred_fallthru
    _

</llo_original>
